<compile_context>
chip_gen: v6e
topology: v6e:2x2x1
jax: 0.10.0
libtpu: 0.0.40
codegen_flags: <defaults>
</compile_context>

<pallas_src>
import functools

import jax
import jax.numpy as jnp
from jax.experimental import pallas as pl
from jax.experimental.pallas import tpu as pltpu

LANES = 128
SUBLANES = 8
MAX_ROW_TILE = 2048   # 2048*128*4B = 1 MiB per input per pipeline buffer (f32)


def _adtnet_loss_kernel(pf_ref, pb_ref, tfg_ref, tbg_ref, tgt_ref, out_ref, *,
                        valid_rows, row_tile, lambda1, lambda2, gamma):
    i = pl.program_id(0)

    # Native-dtype loads, cast to f32 in-kernel (free under the HBM roofline).
    pf = pf_ref[...].astype(jnp.float32)
    pb = pb_ref[...].astype(jnp.float32)
    tfg = tfg_ref[...].astype(jnp.float32)
    tbg = tbg_ref[...].astype(jnp.float32)
    tgt = tgt_ref[...].astype(jnp.float32)

    # PyTorch BCELoss clamps each log term at -100 to avoid inf/NaN.
    clamp = jnp.float32(-100.0)
    log_pf = jnp.maximum(jnp.log(pf), clamp)
    log_1mpf = jnp.maximum(jnp.log(1.0 - pf), clamp)
    log_pb = jnp.maximum(jnp.log(pb), clamp)
    log_1mpb = jnp.maximum(jnp.log(1.0 - pb), clamp)

    d = tfg - tbg

    # BCE(p, t)     = -(log(1-p) + t * (log p    - log(1-p)))
    # BCE(p, 1 - t) = -(log p    + t * (log(1-p) - log p   ))
    # lambda/gamma and the negations folded into pre-scaled constants.
    contrib = (jnp.float32(-lambda1) * (log_1mpf + tgt * (log_pf - log_1mpf))
               + jnp.float32(-lambda2) * (log_pb + tgt * (log_1mpb - log_pb))
               + jnp.float32(gamma) * (d * d))

    def vreg_partial(x):
        # (row_tile,128) -> (row_tile//8, 8, 128) is a pure relayout; the
        # axis-0 reduce is plain VALU vreg adds (no XLU), yielding an (8,128)
        # partial sum that we accumulate into the resident output block.
        return jnp.sum(x.reshape(row_tile // SUBLANES, SUBLANES, LANES), axis=0)

    @pl.when(i == 0)
    def _():
        out_ref[...] = jnp.zeros_like(out_ref)

    if valid_rows % row_tile == 0:
        # No block overhang anywhere (static): unmasked accumulation.
        out_ref[...] += vreg_partial(contrib)
    else:
        last = pl.num_programs(0) - 1

        @pl.when(i < last)
        def _():
            out_ref[...] += vreg_partial(contrib)

        @pl.when(i == last)
        def _():
            # Row-index mask (no int32 element-index overflow).  jnp.where is
            # a select, so NaN/Inf from log(garbage) in the block overhang
            # never propagates into the accumulator.
            row_ids = i * row_tile + jax.lax.broadcasted_iota(
                jnp.int32, (row_tile, LANES), 0)
            out_ref[...] += vreg_partial(
                jnp.where(row_ids < valid_rows, contrib, 0.0))


def _contrib_jnp(pf, pb, tfg, tbg, tgt, lambda1, lambda2, gamma):
    """Plain-jnp per-element contribution (used only for the tiny unaligned tail)."""
    pf = pf.astype(jnp.float32)
    pb = pb.astype(jnp.float32)
    tfg = tfg.astype(jnp.float32)
    tbg = tbg.astype(jnp.float32)
    tgt = tgt.astype(jnp.float32)
    clamp = jnp.float32(-100.0)
    log_pf = jnp.maximum(jnp.log(pf), clamp)
    log_1mpf = jnp.maximum(jnp.log(1.0 - pf), clamp)
    log_pb = jnp.maximum(jnp.log(pb), clamp)
    log_1mpb = jnp.maximum(jnp.log(1.0 - pb), clamp)
    d = tfg - tbg
    return (jnp.float32(-lambda1) * (log_1mpf + tgt * (log_pf - log_1mpf))
            + jnp.float32(-lambda2) * (log_pb + tgt * (log_1mpb - log_pb))
            + jnp.float32(gamma) * (d * d))


@functools.partial(jax.jit, static_argnames=("lambda1", "lambda2", "gamma"))
def adtnet_loss(pred_fg, pred_bg, t_fg, t_bg, target,
                lambda1=1.0, lambda2=1.0, gamma=0.1):
    assert (pred_fg.shape == pred_bg.shape == t_fg.shape == t_bg.shape
            == target.shape), "all five inputs must share a shape"
    lambda1 = float(lambda1)
    lambda2 = float(lambda2)
    gamma = float(gamma)
    n_elem = pred_fg.size

    # Rows streamed by the kernel: a multiple of 8 full 128-lane rows (so the
    # (8,128) / (16,128) tile constraint and the in-kernel (k,8,128) reshape
    # always hold).  The remainder (< 8*128 + 128 elements) is folded in with
    # plain jnp, so the common aligned case needs no concatenate/pad copy.
    valid_rows = (n_elem // LANES // SUBLANES) * SUBLANES
    n_main = valid_rows * LANES

    flats = [x.reshape(-1) for x in (pred_fg, pred_bg, t_fg, t_bg, target)]

    total = jnp.float32(0.0)

    if n_main > 0:
        row_tile = min(MAX_ROW_TILE, valid_rows)
        num_tiles = pl.cdiv(valid_rows, row_tile)

        def as_slab(flat):
            if n_main != n_elem:
                flat = jax.lax.slice(flat, (0,), (n_main,))
            return flat.reshape(valid_rows, LANES)  # pure reshape, native dtype

        slabs = [as_slab(f) for f in flats]

        kernel = functools.partial(
            _adtnet_loss_kernel,
            valid_rows=valid_rows, row_tile=row_tile,
            lambda1=lambda1, lambda2=lambda2, gamma=gamma)

        bytes_in = sum(s.size * s.dtype.itemsize for s in slabs)
        cost = pl.CostEstimate(
            flops=20 * n_main,
            transcendentals=4 * n_main,
            bytes_accessed=bytes_in + SUBLANES * LANES * 4)

        # TODO(synk): on multi-TensorCore parts (v7x) shard the row range
        # across cores (pltpu.CORE_PARALLEL / pl.core_map); plain "parallel"
        # does not reliably split, and on 1-TC chips a split axis only
        # duplicates HBM traffic, so a single sequential axis is used here.
        partial = pl.pallas_call(
            kernel,
            out_shape=jax.ShapeDtypeStruct((SUBLANES, LANES), jnp.float32),
            grid_spec=pltpu.PrefetchScalarGridSpec(
                num_scalar_prefetch=0,
                grid=(num_tiles,),
                in_specs=[pl.BlockSpec((row_tile, LANES),
                                       lambda i: (i, 0))] * 5,
                out_specs=pl.BlockSpec((SUBLANES, LANES), lambda i: (0, 0)),
            ),
            compiler_params=pltpu.CompilerParams(
                dimension_semantics=("arbitrary",),
                vmem_limit_bytes=32 * 1024 * 1024),
            cost_estimate=cost,
        )(*slabs)

        total = total + jnp.sum(partial)

    if n_main != n_elem:
        # Tiny remainder (< 1152 elements): plain jnp, no full-array copy.
        tails = [jax.lax.slice(f, (n_main,), (n_elem,)) for f in flats]
        total = total + jnp.sum(
            _contrib_jnp(*tails, lambda1, lambda2, gamma))

    # All three means share the same 1/N (all five tensors have one shape).
    return total / jnp.float32(n_elem)


def _reference(pred_fg, pred_bg, t_fg, t_bg, target,
               lambda1=1.0, lambda2=1.0, gamma=0.1):
    clamp = -100.0

    def bce(p, t):
        lp = jnp.maximum(jnp.log(p), clamp)
        l1p = jnp.maximum(jnp.log(1.0 - p), clamp)
        return jnp.mean(-(t * lp + (1.0 - t) * l1p))

    loss_fg = bce(pred_fg, target)
    loss_bg = bce(pred_bg, 1.0 - target)
    loss_thresh = jnp.mean((t_fg - t_bg) ** 2)
    return lambda1 * loss_fg + lambda2 * loss_bg + gamma * loss_thresh


if __name__ == "__main__":
    key = jax.random.PRNGKey(0)
    k1, k2, k3, k4, k5 = jax.random.split(key, 5)

    B, C, H, W = 2, 4, 16, 16  # NCHW, matching the PyTorch module's usage
    shape = (B, C, H, W)

    pred_fg = jax.nn.sigmoid(jax.random.normal(k1, shape, jnp.float32))
    pred_bg = jax.nn.sigmoid(jax.random.normal(k2, shape, jnp.float32))
    t_fg = jax.random.normal(k3, shape, jnp.float32)
    t_bg = jax.random.normal(k4, shape, jnp.float32)
    target = (jax.random.uniform(k5, shape) > 0.5).astype(jnp.float32)

    out = adtnet_loss(pred_fg, pred_bg, t_fg, t_bg, target)
    out = jax.block_until_ready(out)

    ref = _reference(pred_fg, pred_bg, t_fg, t_bg, target)
    assert jnp.allclose(out, ref, rtol=1e-5, atol=1e-5), (out, ref)

    print("KERNEL_OK")
</pallas_src>

<mosaic_0001>
module attributes {stable_mosaic.version = 11 : i64} {
  func.func @_adtnet_loss_kernel(%arg0: i32, %arg1: memref<16x128xf32, #tpu.memory_space<vmem>>, %arg2: memref<16x128xf32, #tpu.memory_space<vmem>>, %arg3: memref<16x128xf32, #tpu.memory_space<vmem>>, %arg4: memref<16x128xf32, #tpu.memory_space<vmem>>, %arg5: memref<16x128xf32, #tpu.memory_space<vmem>>, %arg6: memref<8x128xf32, #tpu.memory_space<vmem>>) attributes {dimension_semantics = [#tpu.dimension_semantics<arbitrary>], iteration_bounds = array<i64: 1>, scalar_prefetch = 0 : i64, scratch_operands = 0 : i64, tpu.core_type = #tpu.core_type<tc>, window_params = [{transform_indices = @transform_0, window_bounds = array<i64: 16, 128>}, {transform_indices = @transform_1, window_bounds = array<i64: 16, 128>}, {transform_indices = @transform_2, window_bounds = array<i64: 16, 128>}, {transform_indices = @transform_3, window_bounds = array<i64: 16, 128>}, {transform_indices = @transform_4, window_bounds = array<i64: 16, 128>}, {pipeline_mode = #tpu.pipeline_mode<synchronous>, transform_indices = @transform_5, window_bounds = array<i64: 8, 128>}]} {
    %c0 = arith.constant 0 : index
    %c0_0 = arith.constant 0 : index
    %0 = vector.load %arg1[%c0, %c0_0] : memref<16x128xf32, #tpu.memory_space<vmem>>, vector<16x128xf32>
    %c0_1 = arith.constant 0 : index
    %c0_2 = arith.constant 0 : index
    %1 = vector.load %arg2[%c0_1, %c0_2] : memref<16x128xf32, #tpu.memory_space<vmem>>, vector<16x128xf32>
    %c0_3 = arith.constant 0 : index
    %c0_4 = arith.constant 0 : index
    %2 = vector.load %arg3[%c0_3, %c0_4] : memref<16x128xf32, #tpu.memory_space<vmem>>, vector<16x128xf32>
    %c0_5 = arith.constant 0 : index
    %c0_6 = arith.constant 0 : index
    %3 = vector.load %arg4[%c0_5, %c0_6] : memref<16x128xf32, #tpu.memory_space<vmem>>, vector<16x128xf32>
    %c0_7 = arith.constant 0 : index
    %c0_8 = arith.constant 0 : index
    %4 = vector.load %arg5[%c0_7, %c0_8] : memref<16x128xf32, #tpu.memory_space<vmem>>, vector<16x128xf32>
    %5 = math.log %0 : vector<16x128xf32>
    %cst = arith.constant -1.000000e+02 : f32
    %6 = vector.broadcast %cst : f32 to vector<16x128xf32>
    %7 = arith.maximumf %5, %6 : vector<16x128xf32>
    %cst_9 = arith.constant 1.000000e+00 : f32
    %8 = vector.broadcast %cst_9 : f32 to vector<16x128xf32>
    %9 = arith.subf %8, %0 : vector<16x128xf32>
    %10 = math.log %9 : vector<16x128xf32>
    %cst_10 = arith.constant -1.000000e+02 : f32
    %11 = vector.broadcast %cst_10 : f32 to vector<16x128xf32>
    %12 = arith.maximumf %10, %11 : vector<16x128xf32>
    %13 = math.log %1 : vector<16x128xf32>
    %cst_11 = arith.constant -1.000000e+02 : f32
    %14 = vector.broadcast %cst_11 : f32 to vector<16x128xf32>
    %15 = arith.maximumf %13, %14 : vector<16x128xf32>
    %cst_12 = arith.constant 1.000000e+00 : f32
    %16 = vector.broadcast %cst_12 : f32 to vector<16x128xf32>
    %17 = arith.subf %16, %1 : vector<16x128xf32>
    %18 = math.log %17 : vector<16x128xf32>
    %cst_13 = arith.constant -1.000000e+02 : f32
    %19 = vector.broadcast %cst_13 : f32 to vector<16x128xf32>
    %20 = arith.maximumf %18, %19 : vector<16x128xf32>
    %21 = arith.subf %2, %3 : vector<16x128xf32>
    %22 = arith.subf %7, %12 : vector<16x128xf32>
    %23 = arith.mulf %4, %22 : vector<16x128xf32>
    %24 = arith.addf %12, %23 : vector<16x128xf32>
    %cst_14 = arith.constant -1.000000e+00 : f32
    %25 = vector.broadcast %cst_14 : f32 to vector<16x128xf32>
    %26 = arith.mulf %25, %24 : vector<16x128xf32>
    %27 = arith.subf %20, %15 : vector<16x128xf32>
    %28 = arith.mulf %4, %27 : vector<16x128xf32>
    %29 = arith.addf %15, %28 : vector<16x128xf32>
    %cst_15 = arith.constant -1.000000e+00 : f32
    %30 = vector.broadcast %cst_15 : f32 to vector<16x128xf32>
    %31 = arith.mulf %30, %29 : vector<16x128xf32>
    %32 = arith.addf %26, %31 : vector<16x128xf32>
    %33 = arith.mulf %21, %21 : vector<16x128xf32>
    %cst_16 = arith.constant 1.000000e-01 : f32
    %34 = vector.broadcast %cst_16 : f32 to vector<16x128xf32>
    %35 = arith.mulf %34, %33 : vector<16x128xf32>
    %36 = arith.addf %32, %35 : vector<16x128xf32>
    %c0_i32 = arith.constant 0 : i32
    %37 = arith.cmpi eq, %arg0, %c0_i32 : i32
    %38 = arith.extui %37 : i1 to i32
    %c0_i32_17 = arith.constant 0 : i32
    %39 = arith.cmpi ne, %38, %c0_i32_17 : i32
    scf.if %39 {
      %cst_23 = arith.constant 0.000000e+00 : f32
      %45 = vector.broadcast %cst_23 : f32 to vector<8x128xf32>
      %c0_24 = arith.constant 0 : index
      %c0_25 = arith.constant 0 : index
      %46 = vector.load %arg6[%c0_24, %c0_25] : memref<8x128xf32, #tpu.memory_space<vmem>>, vector<8x128xf32>
      tpu.vector_store %arg6[%c0_24, %c0_25], %45 {strides = array<i32>} : memref<8x128xf32, #tpu.memory_space<vmem>>, vector<8x128xf32>,
    } else {
    }
    %c0_18 = arith.constant 0 : index
    %c0_19 = arith.constant 0 : index
    %40 = vector.load %arg6[%c0_18, %c0_19] : memref<8x128xf32, #tpu.memory_space<vmem>>, vector<8x128xf32>
    %41 = vector.shape_cast %36 : vector<16x128xf32> to vector<2x8x128xf32>
    %cst_20 = arith.constant dense<0.000000e+00> : vector<8x128xf32>
    %42 = vector.multi_reduction <add>, %41, %cst_20 [0] : vector<2x8x128xf32> to vector<8x128xf32>
    %43 = arith.addf %40, %42 : vector<8x128xf32>
    %c0_21 = arith.constant 0 : index
    %c0_22 = arith.constant 0 : index
    %44 = vector.load %arg6[%c0_21, %c0_22] : memref<8x128xf32, #tpu.memory_space<vmem>>, vector<8x128xf32>
    tpu.vector_store %arg6[%c0_21, %c0_22], %43 {strides = array<i32>} : memref<8x128xf32, #tpu.memory_space<vmem>>, vector<8x128xf32>,
    return
  }
  func.func @transform_0(%arg0: i32) -> (i32, i32) {
    %c0_i32 = arith.constant 0 : i32
    %c0_i32_0 = arith.constant 0 : i32
    return %arg0, %c0_i32 : i32, i32
  }
  func.func @transform_1(%arg0: i32) -> (i32, i32) {
    %c0_i32 = arith.constant 0 : i32
    %c0_i32_0 = arith.constant 0 : i32
    return %arg0, %c0_i32 : i32, i32
  }
  func.func @transform_2(%arg0: i32) -> (i32, i32) {
    %c0_i32 = arith.constant 0 : i32
    %c0_i32_0 = arith.constant 0 : i32
    return %arg0, %c0_i32 : i32, i32
  }
  func.func @transform_3(%arg0: i32) -> (i32, i32) {
    %c0_i32 = arith.constant 0 : i32
    %c0_i32_0 = arith.constant 0 : i32
    return %arg0, %c0_i32 : i32, i32
  }
  func.func @transform_4(%arg0: i32) -> (i32, i32) {
    %c0_i32 = arith.constant 0 : i32
    %c0_i32_0 = arith.constant 0 : i32
    return %arg0, %c0_i32 : i32, i32
  }
  func.func @transform_5(%arg0: i32) -> (i32, i32) {
    %c0_i32 = arith.constant 0 : i32
    %c0_i32_0 = arith.constant 0 : i32
    %c0_i32_1 = arith.constant 0 : i32
    return %c0_i32, %c0_i32_0 : i32, i32
  }
}

</mosaic_0001>

<llo_original>
// kernel: adtnet_loss.1
$region0: #{adtnet_loss.1}
  #allocation0 [shape = 'u32[]', space=smem, size = 0x4, offset = 0x4, fixed_abs, tag = 'smem constant byte address 0x4 - core index']
  #allocation1 [shape = 'u32[144,128]{1,0:T(1,128)}', space=vmem, size = 0x12000, scoped, tag = 'internal scratch']
  %s0 = inlined_call_operand.vmem [shape: f32[16,128], index: 0, kind: input, shape index: {}]
  %s1 = inlined_call_operand.vmem [shape: f32[16,128], index: 1, kind: input, shape index: {}]
  %s2 = inlined_call_operand.vmem [shape: f32[16,128], index: 2, kind: input, shape index: {}]
  %s3 = inlined_call_operand.vmem [shape: f32[16,128], index: 3, kind: input, shape index: {}]
  %s4 = inlined_call_operand.vmem [shape: f32[16,128], index: 4, kind: input, shape index: {}]
  %s5 = inlined_call_operand.vmem [shape: f32[8,128], index: 5, kind: output, shape index: {}]
  %s6 = sld [smem:[#allocation0]]
  $region34: #{adtnet_loss.1} parent=0
    _
  %s8 = ssub.s32 1, %s6
  %s9 = scalar_select 0, %s8, %s6
  // Predicated region
  $region2: #{adtnet_loss.1} parent=0 // pred_check
    _
  $region3: #{adtnet_loss.1} parent=0 // pred_check_branch
    %11 = sbr.rel (0) target = $region5
  $region4: #{adtnet_loss.1} parent=0 // pred_region
    _
  $region5: #{adtnet_loss.1} parent=0 // pred_fallthru
    _
  // Predicated region
  $region6: #{adtnet_loss.1} parent=0 // pred_check
    _
  $region7: #{adtnet_loss.1} parent=0 // pred_check_branch
    %13 = sbr.rel (0) target = $region9
  $region8: #{adtnet_loss.1} parent=0 // pred_region
    _
  $region9: #{adtnet_loss.1} parent=0 // pred_fallthru
    _
  // Predicated region
  $region10: #{adtnet_loss.1} parent=0 // pred_check
    _
  $region11: #{adtnet_loss.1} parent=0 // pred_check_branch
    %15 = sbr.rel (0) target = $region13
  $region12: #{adtnet_loss.1} parent=0 // pred_region
    _
  $region13: #{adtnet_loss.1} parent=0 // pred_fallthru
    _
  // Predicated region
  $region14: #{adtnet_loss.1} parent=0 // pred_check
    _
  $region15: #{adtnet_loss.1} parent=0 // pred_check_branch
    %17 = sbr.rel (0) target = $region17
  $region16: #{adtnet_loss.1} parent=0 // pred_region
    _
  $region17: #{adtnet_loss.1} parent=0 // pred_fallthru
    _
  // Predicated region
  $region18: #{adtnet_loss.1} parent=0 // pred_check
    _
  $region19: #{adtnet_loss.1} parent=0 // pred_check_branch
    %19 = sbr.rel (0) target = $region21
  $region20: #{adtnet_loss.1} parent=0 // pred_region
    _
  $region21: #{adtnet_loss.1} parent=0 // pred_fallthru
    _
  %v20 = vld [vmem:[%s0] sm:$0xff]
  %v21 = vld [vmem:[%s0 + $0x8] sm:$0xff]
  %v22 = vld [vmem:[%s1] sm:$0xff]
  %v23 = vld [vmem:[%s1 + $0x8] sm:$0xff]
  %v24 = vld [vmem:[%s2] sm:$0xff]
  %v25 = vld [vmem:[%s2 + $0x8] sm:$0xff]
  %v26 = vld [vmem:[%s3] sm:$0xff]
  %v27 = vld [vmem:[%s3 + $0x8] sm:$0xff]
  %v28 = vld [vmem:[%s4] sm:$0xff]
  %v29 = vld [vmem:[%s4 + $0x8] sm:$0xff]
  %v30 = vlog2.pop %v20
  %v31 = vmul.f32 %v30, 0.6931472
  %v32 = vlog2.pop %v21
  %v33 = vmul.f32 %v32, 0.6931472
  %v34 = vmax.f32 %v31, -100.0
  %v35 = vmax.f32 %v33, -100.0
  %v36 = vsub.f32 1.0, %v20
  %v37 = vsub.f32 1.0, %v21
  %v38 = vlog2.pop %v36
  %v39 = vmul.f32 %v38, 0.6931472
  %v40 = vlog2.pop %v37
  %v41 = vmul.f32 %v40, 0.6931472
  %v42 = vmax.f32 %v39, -100.0
  %v43 = vmax.f32 %v41, -100.0
  %v44 = vlog2.pop %v22
  %v45 = vmul.f32 %v44, 0.6931472
  %v46 = vlog2.pop %v23
  %v47 = vmul.f32 %v46, 0.6931472
  %v48 = vmax.f32 %v45, -100.0
  %v49 = vmax.f32 %v47, -100.0
  %v50 = vsub.f32 1.0, %v22
  %v51 = vsub.f32 1.0, %v23
  %v52 = vlog2.pop %v50
  %v53 = vmul.f32 %v52, 0.6931472
  %v54 = vlog2.pop %v51
  %v55 = vmul.f32 %v54, 0.6931472
  %v56 = vmax.f32 %v53, -100.0
  %v57 = vmax.f32 %v55, -100.0
  %v58 = vsub.f32 %v24, %v26
  %v59 = vsub.f32 %v25, %v27
  %v60 = vsub.f32 %v34, %v42
  %v61 = vsub.f32 %v35, %v43
  %v62 = vmul.f32 %v28, %v60
  %v63 = vmul.f32 %v29, %v61
  %v64 = vadd.f32 %v42, %v62
  %v65 = vadd.f32 %v43, %v63
  %v66 = vmul.f32 %v64, -1.0
  %v67 = vmul.f32 %v65, -1.0
  %v68 = vsub.f32 %v56, %v48
  %v69 = vsub.f32 %v57, %v49
  %v70 = vmul.f32 %v28, %v68
  %v71 = vmul.f32 %v29, %v69
  %v72 = vadd.f32 %v48, %v70
  %v73 = vadd.f32 %v49, %v71
  %v74 = vmul.f32 %v72, -1.0
  %v75 = vmul.f32 %v73, -1.0
  %v76 = vadd.f32 %v66, %v74
  %v77 = vadd.f32 %v67, %v75
  %v78 = vmul.f32 %v58, %v58
  %v79 = vmul.f32 %v59, %v59
  %v80 = vmul.f32 %v78, 0.1
  %v81 = vmul.f32 %v79, 0.1
  %v82 = vadd.f32 %v76, %v80
  %v83 = vadd.f32 %v77, %v81
  %p84 = scmp.eq.s32.totalorder 0, 0
  // Predicated region
  $region22: #{adtnet_loss.1} parent=0 // pred_check
    %p85 = pneg %p84
  $region23: #{adtnet_loss.1} parent=0 // pred_check_branch
    %87 = sbr.rel (%p85) target = $region25
  $region24: #{adtnet_loss.1} parent=0 // pred_region
    %88 = vst [vmem:[%s5] sm:$0xff] 0.0
  $region25: #{adtnet_loss.1} parent=0 // pred_fallthru
    _
  %v89 = vld [vmem:[%s5] sm:$0xff]
  %v90 = vadd.f32 %v82, %v83
  %v91 = vadd.f32 %v89, %v90
  %92 = vst [vmem:[%s5] sm:$0xff] %v91
  // Predicated region
  $region26: #{adtnet_loss.1} parent=0 // pred_check
    _
  $region27: #{adtnet_loss.1} parent=0 // pred_check_branch
    %94 = sbr.rel (0) target = $region29
  $region28: #{adtnet_loss.1} parent=0 // pred_region
    _
  $region29: #{adtnet_loss.1} parent=0 // pred_fallthru
    _
  // Predicated region
  $region30: #{adtnet_loss.1} parent=0 // pred_check
    _
  $region31: #{adtnet_loss.1} parent=0 // pred_check_branch
    %96 = sbr.rel (0) target = $region33
  $region32: #{adtnet_loss.1} parent=0 // pred_region
    _
  $region33: #{adtnet_loss.1} parent=0 // pred_fallthru
    _

</llo_original>
